<compile_context>
chip_gen: v5e
topology: v5e:2x2
jax: 0.10.0
libtpu: 0.0.40
codegen_flags: <defaults>
</compile_context>

<pallas_src>
import jax
import jax.numpy as jnp
from jax import lax
from jax.experimental import pallas as pl
from jax.experimental.pallas import tpu as pltpu

NUM_CLASSES = 10
EPS = 1e-5          # nn.BatchNorm2d default eps
STRIDE = 2          # fixed by the module
KH = KW = 3         # fixed by the module (kernel_size=3)


def branch_fused_kernel(patches_ref, wconv_ref, bconv_ref, gamma_ref, beta_ref,
                        wck_ref, rowmask_ref, ssel_ref, gsel_ref, bfc_ref, out_ref):
    """Fused Conv(as matmul) + bias + ReLU + BatchNorm(batch stats) + Linear.

    patches_ref : (R, KH*KW*CIN)   R = N*OH*OW, rows ordered (n, oh, ow), cols (kh, kw, cin)
    wconv_ref   : (KH*KW*CIN, COUT)
    bconv/gamma/beta : (1, COUT)
    wck_ref     : (COUT, P*K)      wck[c, p*K + k] = Wfc[p, c, k]      (P = OH*OW, K = classes)
    rowmask_ref : (R, P*K)         1.0 where (m // K) == (r % P)
    ssel_ref    : (N, R)           1.0 where (r // P) == n
    gsel_ref    : (P*K, K)         1.0 where (m % K) == k
    bfc_ref     : (1, K)
    out_ref     : (N, K)
    """
    # ---- Conv as a dense 2-D MXU matmul + bias + ReLU ----
    conv = jnp.dot(patches_ref[...], wconv_ref[...], preferred_element_type=jnp.float32)
    conv = jnp.maximum(conv + bconv_ref[...], 0.0)

    # ---- BatchNorm2d (training mode, biased batch variance), single pass: E[x], E[x^2] ----
    inv_r = 1.0 / conv.shape[0]
    mean = jnp.sum(conv, axis=0, keepdims=True) * inv_r
    var = jnp.maximum(jnp.sum(conv * conv, axis=0, keepdims=True) * inv_r - mean * mean, 0.0)
    scale = gamma_ref[...] * lax.rsqrt(var + EPS)
    shift = beta_ref[...] - mean * scale
    bn = conv * scale + shift                                   # (R, COUT) stays on-chip

    # ---- Linear, without relayouting (R, COUT) -> (N, P*COUT) ----
    # d[r, p*K+k] = sum_c bn[r, c] * Wfc[p, c, k]
    # h[n, p*K+k] = d[n*P+p, p*K+k]      (row mask + per-sample row-sum selector matmul)
    # out[n, k]   = sum_p h[n, p*K+k]    (class-gather matmul) + bfc[k]
    d = jnp.dot(bn, wck_ref[...], preferred_element_type=jnp.float32)                    # (R, P*K)
    h = jnp.dot(ssel_ref[...], d * rowmask_ref[...], preferred_element_type=jnp.float32)  # (N, P*K)
    out_ref[...] = jnp.dot(h, gsel_ref[...], preferred_element_type=jnp.float32) + bfc_ref[...]


def _im2col_nhwc(x_nhwc, kh, kw, stride):
    n, h, w, c = x_nhwc.shape
    oh = (h - kh) // stride + 1
    ow = (w - kw) // stride + 1
    taps = [x_nhwc[:, i:i + stride * oh:stride, j:j + stride * ow:stride, :]
            for i in range(kh) for j in range(kw)]
    # (N, OH, OW, KH*KW*C) -> (N*OH*OW, KH*KW*C); column order = (kh, kw, cin)
    patches = jnp.concatenate(taps, axis=-1).reshape(n * oh * ow, kh * kw * c)
    return patches, oh, ow


def prepare_branch_params(params, batch, in_hw):
    """Hoisted (one-time) weight permutations and selector constants.

    params are in PyTorch layout:
      wconv (COUT, CIN, KH, KW), bconv (COUT,), gamma (COUT,), beta (COUT,),
      wfc (K, COUT*OH*OW) with PyTorch flatten order (c, oh, ow), bfc (K,)
    """
    wconv, bconv, gamma, beta, wfc, bfc = params
    cout, cin, kh, kw = wconv.shape
    h, w = in_hw
    oh = (h - kh) // STRIDE + 1
    ow = (w - kw) // STRIDE + 1
    p = oh * ow
    k = wfc.shape[0]
    r = batch * p

    # Conv weight -> matmul form with (kh, kw, cin) row ordering (matches im2col columns).
    wconv_mat = jnp.transpose(wconv, (2, 3, 1, 0)).reshape(kh * kw * cin, cout)

    # FC weight: PyTorch flatten order is (c, oh, ow)  ->  Wfc3[p, c, k].
    wfc3 = jnp.transpose(wfc.reshape(k, cout, p), (2, 1, 0))            # (P, COUT, K)
    wck = jnp.transpose(wfc3, (1, 0, 2)).reshape(cout, p * k)           # (COUT, P*K)

    # Constant selector matrices so the in-kernel FC is pure 2-D matmuls (no relayout).
    rr = jnp.arange(r, dtype=jnp.int32)
    mm = jnp.arange(p * k, dtype=jnp.int32)
    rowmask = ((rr[:, None] % p) == (mm[None, :] // k)).astype(jnp.float32)     # (R, P*K)
    ssel = ((rr[None, :] // p) ==
            jnp.arange(batch, dtype=jnp.int32)[:, None]).astype(jnp.float32)    # (N, R)
    gsel = ((mm[:, None] % k) ==
            jnp.arange(k, dtype=jnp.int32)[None, :]).astype(jnp.float32)        # (P*K, K)

    return dict(
        wconv_mat=wconv_mat,
        bconv=bconv.reshape(1, cout).astype(jnp.float32),
        gamma=gamma.reshape(1, cout).astype(jnp.float32),
        beta=beta.reshape(1, cout).astype(jnp.float32),
        wck=wck,
        rowmask=rowmask,
        ssel=ssel,
        gsel=gsel,
        bfc=bfc.reshape(1, k).astype(jnp.float32),
    )


@jax.jit
def branch_forward(x_nchw, prep):
    """x_nchw: (N, CIN, H, W); prep: dict from prepare_branch_params (arrays only)."""
    n = x_nchw.shape[0]
    x_nhwc = jnp.transpose(x_nchw, (0, 2, 3, 1))
    patches, _, _ = _im2col_nhwc(x_nhwc, KH, KW, STRIDE)
    # TODO(synk): im2col could move fully in-kernel via strided ref reads
    # (x_ref[:, pl.ds(i, OH, 2), pl.ds(j, OW, 2), :]); kept in the jitted wrapper here and
    # allowed to fuse into the Mosaic call through allow_input_fusion.

    args = (patches, prep["wconv_mat"], prep["bconv"], prep["gamma"], prep["beta"],
            prep["wck"], prep["rowmask"], prep["ssel"], prep["gsel"], prep["bfc"])
    vmem = pl.BlockSpec(memory_space=pltpu.MemorySpace.VMEM)

    return pl.pallas_call(
        branch_fused_kernel,
        out_shape=jax.ShapeDtypeStruct((n, NUM_CLASSES), jnp.float32),
        in_specs=[vmem] * len(args),
        out_specs=vmem,
        compiler_params=pltpu.CompilerParams(
            allow_input_fusion=[True] + [False] * (len(args) - 1)),
    )(*args)


def branch_reference(x_nchw, params):
    """Pure-JAX reference matching the PyTorch module (training-mode BatchNorm)."""
    wconv, bconv, gamma, beta, wfc, bfc = params
    y = lax.conv_general_dilated(
        x_nchw, wconv, window_strides=(STRIDE, STRIDE), padding="VALID",
        dimension_numbers=("NCHW", "OIHW", "NCHW"),
    )
    y = y + bconv.reshape(1, -1, 1, 1)
    y = jnp.maximum(y, 0.0)
    mean = jnp.mean(y, axis=(0, 2, 3), keepdims=True)
    var = jnp.mean((y - mean) ** 2, axis=(0, 2, 3), keepdims=True)
    y = (y - mean) * lax.rsqrt(var + EPS) * gamma.reshape(1, -1, 1, 1) + beta.reshape(1, -1, 1, 1)
    flat = y.reshape(x_nchw.shape[0], -1)
    return flat @ wfc.T + bfc


if __name__ == "__main__":
    # Shapes consistent with the module: in_channels=4, 16x16 input
    # -> conv out (N, 16, 7, 7) -> in_features = 16*7*7 = 784.
    N, CIN, H, W = 2, 4, 16, 16
    COUT = 16
    OH = OW = (H - KH) // STRIDE + 1
    IN_FEATURES = COUT * OH * OW

    key = jax.random.PRNGKey(0)
    ks = jax.random.split(key, 7)
    x = jax.random.normal(ks[0], (N, CIN, H, W), jnp.float32)
    wconv = 0.10 * jax.random.normal(ks[1], (COUT, CIN, KH, KW), jnp.float32)
    bconv = 0.10 * jax.random.normal(ks[2], (COUT,), jnp.float32)
    gamma = 1.0 + 0.10 * jax.random.normal(ks[3], (COUT,), jnp.float32)
    beta = 0.10 * jax.random.normal(ks[4], (COUT,), jnp.float32)
    wfc = 0.05 * jax.random.normal(ks[5], (NUM_CLASSES, IN_FEATURES), jnp.float32)
    bfc = 0.10 * jax.random.normal(ks[6], (NUM_CLASSES,), jnp.float32)
    params = (wconv, bconv, gamma, beta, wfc, bfc)

    # One-time (hoisted) weight permutations + selector constants.
    prep = prepare_branch_params(params, batch=N, in_hw=(H, W))

    out = branch_forward(x, prep)
    jax.block_until_ready(out)

    ref = branch_reference(x, params)
    assert out.shape == (N, NUM_CLASSES)
    assert jnp.allclose(out, ref, atol=1e-3, rtol=1e-3), (out, ref)
    print("KERNEL_OK")
</pallas_src>

<mosaic_0001>
module attributes {stable_mosaic.version = 11 : i64} {
  func.func @branch_fused_kernel(%arg0: memref<98x36xf32, #tpu.memory_space<vmem>>, %arg1: memref<36x16xf32, #tpu.memory_space<vmem>>, %arg2: memref<1x16xf32, #tpu.memory_space<vmem>>, %arg3: memref<1x16xf32, #tpu.memory_space<vmem>>, %arg4: memref<1x16xf32, #tpu.memory_space<vmem>>, %arg5: memref<16x490xf32, #tpu.memory_space<vmem>>, %arg6: memref<98x490xf32, #tpu.memory_space<vmem>>, %arg7: memref<2x98xf32, #tpu.memory_space<vmem>>, %arg8: memref<490x10xf32, #tpu.memory_space<vmem>>, %arg9: memref<1x10xf32, #tpu.memory_space<vmem>>, %arg10: memref<2x10xf32, #tpu.memory_space<vmem>>) attributes {dimension_semantics = [], scalar_prefetch = 0 : i64, scratch_operands = 0 : i64, tpu.core_type = #tpu.core_type<tc>} {
    %c0 = arith.constant 0 : index
    %c0_0 = arith.constant 0 : index
    %0 = vector.load %arg0[%c0, %c0_0] : memref<98x36xf32, #tpu.memory_space<vmem>>, vector<98x36xf32>
    %c0_1 = arith.constant 0 : index
    %c0_2 = arith.constant 0 : index
    %1 = vector.load %arg1[%c0_1, %c0_2] : memref<36x16xf32, #tpu.memory_space<vmem>>, vector<36x16xf32>
    %cst = arith.constant dense<0.000000e+00> : vector<98x16xf32>
    %2 = tpu.matmul %0, %1, %cst {dimension_numbers = #tpu.dot_dimension_numbers<[1], [0], [0], [1], [0, 0, 1, 1], [], []>} : vector<98x36xf32>, vector<36x16xf32>, vector<98x16xf32> -> vector<98x16xf32>
    %c0_3 = arith.constant 0 : index
    %c0_4 = arith.constant 0 : index
    %3 = vector.load %arg2[%c0_3, %c0_4] : memref<1x16xf32, #tpu.memory_space<vmem>>, vector<1x16xf32>
    %4 = vector.broadcast %3 : vector<1x16xf32> to vector<98x16xf32>
    %5 = arith.addf %2, %4 : vector<98x16xf32>
    %cst_5 = arith.constant 0.000000e+00 : f32
    %6 = vector.broadcast %cst_5 : f32 to vector<98x16xf32>
    %7 = arith.maximumf %5, %6 : vector<98x16xf32>
    %cst_6 = arith.constant dense<0.000000e+00> : vector<16xf32>
    %8 = vector.multi_reduction <add>, %7, %cst_6 [0] : vector<98x16xf32> to vector<16xf32>
    %9 = vector.shape_cast %8 : vector<16xf32> to vector<1x16xf32>
    %cst_7 = arith.constant 0.0102040814 : f32
    %10 = vector.broadcast %cst_7 : f32 to vector<1x16xf32>
    %11 = arith.mulf %9, %10 : vector<1x16xf32>
    %12 = arith.mulf %7, %7 : vector<98x16xf32>
    %cst_8 = arith.constant dense<0.000000e+00> : vector<16xf32>
    %13 = vector.multi_reduction <add>, %12, %cst_8 [0] : vector<98x16xf32> to vector<16xf32>
    %14 = vector.shape_cast %13 : vector<16xf32> to vector<1x16xf32>
    %cst_9 = arith.constant 0.0102040814 : f32
    %15 = vector.broadcast %cst_9 : f32 to vector<1x16xf32>
    %16 = arith.mulf %14, %15 : vector<1x16xf32>
    %17 = arith.mulf %11, %11 : vector<1x16xf32>
    %18 = arith.subf %16, %17 : vector<1x16xf32>
    %cst_10 = arith.constant 0.000000e+00 : f32
    %19 = vector.broadcast %cst_10 : f32 to vector<1x16xf32>
    %20 = arith.maximumf %18, %19 : vector<1x16xf32>
    %c0_11 = arith.constant 0 : index
    %c0_12 = arith.constant 0 : index
    %21 = vector.load %arg3[%c0_11, %c0_12] : memref<1x16xf32, #tpu.memory_space<vmem>>, vector<1x16xf32>
    %cst_13 = arith.constant 9.99999974E-6 : f32
    %22 = vector.broadcast %cst_13 : f32 to vector<1x16xf32>
    %23 = arith.addf %20, %22 : vector<1x16xf32>
    %24 = math.rsqrt %23 : vector<1x16xf32>
    %25 = arith.mulf %21, %24 : vector<1x16xf32>
    %c0_14 = arith.constant 0 : index
    %c0_15 = arith.constant 0 : index
    %26 = vector.load %arg4[%c0_14, %c0_15] : memref<1x16xf32, #tpu.memory_space<vmem>>, vector<1x16xf32>
    %27 = arith.mulf %11, %25 : vector<1x16xf32>
    %28 = arith.subf %26, %27 : vector<1x16xf32>
    %29 = vector.broadcast %25 : vector<1x16xf32> to vector<98x16xf32>
    %30 = arith.mulf %7, %29 : vector<98x16xf32>
    %31 = vector.broadcast %28 : vector<1x16xf32> to vector<98x16xf32>
    %32 = arith.addf %30, %31 : vector<98x16xf32>
    %c0_16 = arith.constant 0 : index
    %c0_17 = arith.constant 0 : index
    %33 = vector.load %arg5[%c0_16, %c0_17] : memref<16x490xf32, #tpu.memory_space<vmem>>, vector<16x490xf32>
    %cst_18 = arith.constant dense<0.000000e+00> : vector<98x490xf32>
    %34 = tpu.matmul %32, %33, %cst_18 {dimension_numbers = #tpu.dot_dimension_numbers<[1], [0], [0], [1], [0, 0, 1, 1], [], []>} : vector<98x16xf32>, vector<16x490xf32>, vector<98x490xf32> -> vector<98x490xf32>
    %c0_19 = arith.constant 0 : index
    %c0_20 = arith.constant 0 : index
    %35 = vector.load %arg7[%c0_19, %c0_20] : memref<2x98xf32, #tpu.memory_space<vmem>>, vector<2x98xf32>
    %c0_21 = arith.constant 0 : index
    %c0_22 = arith.constant 0 : index
    %36 = vector.load %arg6[%c0_21, %c0_22] : memref<98x490xf32, #tpu.memory_space<vmem>>, vector<98x490xf32>
    %37 = arith.mulf %34, %36 : vector<98x490xf32>
    %cst_23 = arith.constant dense<0.000000e+00> : vector<2x490xf32>
    %38 = tpu.matmul %35, %37, %cst_23 {dimension_numbers = #tpu.dot_dimension_numbers<[1], [0], [0], [1], [0, 0, 1, 1], [], []>} : vector<2x98xf32>, vector<98x490xf32>, vector<2x490xf32> -> vector<2x490xf32>
    %c0_24 = arith.constant 0 : index
    %c0_25 = arith.constant 0 : index
    %39 = vector.load %arg8[%c0_24, %c0_25] : memref<490x10xf32, #tpu.memory_space<vmem>>, vector<490x10xf32>
    %cst_26 = arith.constant dense<0.000000e+00> : vector<2x10xf32>
    %40 = tpu.matmul %38, %39, %cst_26 {dimension_numbers = #tpu.dot_dimension_numbers<[1], [0], [0], [1], [0, 0, 1, 1], [], []>} : vector<2x490xf32>, vector<490x10xf32>, vector<2x10xf32> -> vector<2x10xf32>
    %c0_27 = arith.constant 0 : index
    %c0_28 = arith.constant 0 : index
    %41 = vector.load %arg9[%c0_27, %c0_28] : memref<1x10xf32, #tpu.memory_space<vmem>>, vector<1x10xf32>
    %42 = vector.broadcast %41 : vector<1x10xf32> to vector<2x10xf32>
    %43 = arith.addf %40, %42 : vector<2x10xf32>
    %c0_29 = arith.constant 0 : index
    %c0_30 = arith.constant 0 : index
    %44 = vector.load %arg10[%c0_29, %c0_30] : memref<2x10xf32, #tpu.memory_space<vmem>>, vector<2x10xf32>
    tpu.vector_store %arg10[%c0_29, %c0_30], %43 {strides = array<i32>} : memref<2x10xf32, #tpu.memory_space<vmem>>, vector<2x10xf32>,
    return
  }
}

</mosaic_0001>

<llo_original>
// kernel: branch_forward.1
$region0: #{branch_forward.1}
  #allocation0 [shape = 'u32[]', space=smem, size = 0x4, offset = 0x4, fixed_abs, tag = 'smem constant byte address 0x4 - core index']
  #allocation1 [shape = 'u32[72,128]{1,0:T(1,128)}', space=vmem, size = 0x9000, scoped, tag = 'internal scratch']
  %s0 = inlined_call_operand.vmem [shape: f32[98,36], index: 0, kind: input, shape index: {}]
  %s1 = inlined_call_operand.vmem [shape: f32[36,16], index: 1, kind: input, shape index: {}]
  %s2 = inlined_call_operand.vmem [shape: f32[1,16], index: 2, kind: input, shape index: {}]
  %s3 = inlined_call_operand.vmem [shape: f32[1,16], index: 3, kind: input, shape index: {}]
  %s4 = inlined_call_operand.vmem [shape: f32[1,16], index: 4, kind: input, shape index: {}]
  %s5 = inlined_call_operand.vmem [shape: f32[16,490], index: 5, kind: input, shape index: {}]
  %s6 = inlined_call_operand.vmem [shape: f32[98,490], index: 6, kind: input, shape index: {}]
  %s7 = inlined_call_operand.vmem [shape: f32[2,98], index: 7, kind: input, shape index: {}]
  %s8 = inlined_call_operand.vmem [shape: f32[490,10], index: 8, kind: input, shape index: {}]
  %s9 = inlined_call_operand.vmem [shape: f32[1,10], index: 9, kind: input, shape index: {}]
  %s10 = inlined_call_operand.hbm [shape: f32[2,10], index: 10, kind: output, shape index: {}]
  %s11 = sld [smem:[#allocation0]]
  $region50: #{branch_forward.1} parent=0
    _
  %s13 = ssub.s32 1, %s11
  %s14 = scalar_select 0, %s13, %s11
  $region1: #{branch_forward.1} parent=0
    #allocation2 [shape = 'u8[1024]{0}', space=vmem, size = 0x400, scoped, tag = 'output window, operand 0, single buffered']
    #allocation3 [shape = 's32[1]{0}', space=sflag, size = 0x4, scoped, tag = 'scoped memory for branch_forward.1']
    %15 = vsyncpa [#allocation3], 0
    // Predicated region
    $region2: #{branch_forward.1} parent=1 // pred_check
      _
    $region3: #{branch_forward.1} parent=1 // pred_check_branch
      %17 = sbr.rel (0) target = $region5
    $region4: #{branch_forward.1} parent=1 // pred_region
      _
    $region5: #{branch_forward.1} parent=1 // pred_fallthru
      _
    // Predicated region
    $region6: #{branch_forward.1} parent=1 // pred_check
      _
    $region7: #{branch_forward.1} parent=1 // pred_check_branch
      %19 = sbr.rel (0) target = $region9
    $region8: #{branch_forward.1} parent=1 // pred_region
      _
    $region9: #{branch_forward.1} parent=1 // pred_fallthru
      _
    // Predicated region
    $region10: #{branch_forward.1} parent=1 // pred_check
      _
    $region11: #{branch_forward.1} parent=1 // pred_check_branch
      %21 = sbr.rel (0) target = $region13
    $region12: #{branch_forward.1} parent=1 // pred_region
      _
    $region13: #{branch_forward.1} parent=1 // pred_fallthru
      _
    // Predicated region
    $region14: #{branch_forward.1} parent=1 // pred_check
      _
    $region15: #{branch_forward.1} parent=1 // pred_check_branch
      %23 = sbr.rel (0) target = $region17
    $region16: #{branch_forward.1} parent=1 // pred_region
      _
    $region17: #{branch_forward.1} parent=1 // pred_fallthru
      _
    // Predicated region
    $region18: #{branch_forward.1} parent=1 // pred_check
      _
    $region19: #{branch_forward.1} parent=1 // pred_check_branch
      %25 = sbr.rel (0) target = $region21
    $region20: #{branch_forward.1} parent=1 // pred_region
      _
    $region21: #{branch_forward.1} parent=1 // pred_fallthru
      _
    // Predicated region
    $region22: #{branch_forward.1} parent=1 // pred_check
      _
    $region23: #{branch_forward.1} parent=1 // pred_check_branch
      %27 = sbr.rel (0) target = $region25
    $region24: #{branch_forward.1} parent=1 // pred_region
      _
    $region25: #{branch_forward.1} parent=1 // pred_fallthru
      _
    // Predicated region
    $region26: #{branch_forward.1} parent=1 // pred_check
      _
    $region27: #{branch_forward.1} parent=1 // pred_check_branch
      %29 = sbr.rel (0) target = $region29
    $region28: #{branch_forward.1} parent=1 // pred_region
      _
    $region29: #{branch_forward.1} parent=1 // pred_fallthru
      _
    // Predicated region
    $region30: #{branch_forward.1} parent=1 // pred_check
      _
    $region31: #{branch_forward.1} parent=1 // pred_check_branch
      %31 = sbr.rel (0) target = $region33
    $region32: #{branch_forward.1} parent=1 // pred_region
      _
    $region33: #{branch_forward.1} parent=1 // pred_fallthru
      _
    // Predicated region
    $region34: #{branch_forward.1} parent=1 // pred_check
      _
    $region35: #{branch_forward.1} parent=1 // pred_check_branch
      %33 = sbr.rel (0) target = $region37
    $region36: #{branch_forward.1} parent=1 // pred_region
      _
    $region37: #{branch_forward.1} parent=1 // pred_fallthru
      _
    // Predicated region
    $region38: #{branch_forward.1} parent=1 // pred_check
      _
    $region39: #{branch_forward.1} parent=1 // pred_check_branch
      %35 = sbr.rel (0) target = $region41
    $region40: #{branch_forward.1} parent=1 // pred_region
      _
    $region41: #{branch_forward.1} parent=1 // pred_fallthru
      _
    %v36 = vld [vmem:[%s0] sm:$0xff]
    %v37 = vld [vmem:[%s0 + $0x8] sm:$0xff]
    %v38 = vld [vmem:[%s0 + $0x10] sm:$0xff]
    %v39 = vld [vmem:[%s0 + $0x18] sm:$0xff]
    %v40 = vld [vmem:[%s0 + $0x20] sm:$0xff]
    %v41 = vld [vmem:[%s0 + $0x28] sm:$0xff]
    %v42 = vld [vmem:[%s0 + $0x30] sm:$0xff]
    %v43 = vld [vmem:[%s0 + $0x38] sm:$0xff]
    %v44 = vld [vmem:[%s0 + $0x40] sm:$0xff]
    %v45 = vld [vmem:[%s0 + $0x48] sm:$0xff]
    %v46 = vld [vmem:[%s0 + $0x50] sm:$0xff]
    %v47 = vld [vmem:[%s0 + $0x58] sm:$0xff]
    %v48 = vld [vmem:[%s0 + $0x60] sm:$0x3]
    %v49 = vld [vmem:[%s1] sm:$0xff]
    %v50 = vld [vmem:[%s1 + $0x8] sm:$0xff]
    %v51 = vld [vmem:[%s1 + $0x10] sm:$0xff]
    %v52 = vld [vmem:[%s1 + $0x18] sm:$0xff]
    %v53 = vld [vmem:[%s1 + $0x20] sm:$0xf]
    %v54 = vld [vmem:[%s2] sm:$0x1]
    %v56 = vperm.slane %v54, 0
    %vm58 = vcmask 293888
    %v60 = vsel %vm58, %v36, 0
    %v63 = vsel %vm58, %v37, 0
    %v66 = vsel %vm58, %v38, 0
    %v69 = vsel %vm58, %v39, 0
    %v72 = vsel %vm58, %v40, 0
    %v75 = vsel %vm58, %v41, 0
    %v78 = vsel %vm58, %v42, 0
    %v81 = vsel %vm58, %v43, 0
    %v84 = vsel %vm58, %v44, 0
    %v87 = vsel %vm58, %v45, 0
    %v90 = vsel %vm58, %v46, 0
    %v93 = vsel %vm58, %v47, 0
    %v96 = vsel %vm58, %v48, 0
    %vm98 = vcmask 1043456
    %v100 = vsel %vm98, %v53, 0
    %102 = vmatpush.msra.mxu0 0.0
    %103 = vmatpush.msra.mxu0 0.0
    %104 = vmatpush.msra.mxu0 0.0
    %105 = vmatpush.msra.mxu0 0.0
    %106 = vmatpush.msra.mxu0 0.0
    %107 = vmatpush.msra.mxu0 0.0
    %108 = vmatpush.msra.mxu0 0.0
    %109 = vmatpush.msra.mxu0 0.0
    %110 = vmatpush.msra.mxu0 0.0
    %111 = vmatpush.msra.mxu0 0.0
    %112 = vmatpush.msra.mxu0 0.0
    %113 = vmatpush.msra.mxu0 %v100
    %114 = vmatpush.msra.mxu0 %v52
    %115 = vmatpush.msra.mxu0 %v51
    %116 = vmatpush.msra.mxu0 %v50
    %117 = vmatpush.msra.mxu0 %v49
    %118 = vmatmul.f32.gmra.mxu0 %v60
    %v119 = vpop.f32.mrf.mxu0
    %v120 = vadd.f32 %v56, %v119
    %121 = vmatmul.f32.gmra.mxu0 %v63
    %v122 = vpop.f32.mrf.mxu0
    %v123 = vadd.f32 %v56, %v122
    %124 = vmatmul.f32.gmra.mxu0 %v66
    %v125 = vpop.f32.mrf.mxu0
    %v126 = vadd.f32 %v56, %v125
    %127 = vmatmul.f32.gmra.mxu0 %v69
    %v128 = vpop.f32.mrf.mxu0
    %v129 = vadd.f32 %v56, %v128
    %130 = vmatmul.f32.gmra.mxu0 %v72
    %v131 = vpop.f32.mrf.mxu0
    %v132 = vadd.f32 %v56, %v131
    %133 = vmatmul.f32.gmra.mxu0 %v75
    %v134 = vpop.f32.mrf.mxu0
    %v135 = vadd.f32 %v56, %v134
    %136 = vmatmul.f32.gmra.mxu0 %v78
    %v137 = vpop.f32.mrf.mxu0
    %v138 = vadd.f32 %v56, %v137
    %139 = vmatmul.f32.gmra.mxu0 %v81
    %v140 = vpop.f32.mrf.mxu0
    %v141 = vadd.f32 %v56, %v140
    %142 = vmatmul.f32.gmra.mxu0 %v84
    %v143 = vpop.f32.mrf.mxu0
    %v144 = vadd.f32 %v56, %v143
    %145 = vmatmul.f32.gmra.mxu0 %v87
    %v146 = vpop.f32.mrf.mxu0
    %v147 = vadd.f32 %v56, %v146
    %148 = vmatmul.f32.gmra.mxu0 %v90
    %v149 = vpop.f32.mrf.mxu0
    %v150 = vadd.f32 %v56, %v149
    %151 = vmatmul.f32.gmra.mxu0 %v93
    %v152 = vpop.f32.mrf.mxu0
    %v153 = vadd.f32 %v56, %v152
    %154 = vmatmul.f32.gmra.mxu0 %v96
    %v155 = vpop.f32.mrf.mxu0
    %v156 = vadd.f32 %v56, %v155
    %157 = vdwg.mxu0
    %v158 = vmax.f32 %v120, 0.0
    %v159 = vmax.f32 %v123, 0.0
    %v160 = vmax.f32 %v126, 0.0
    %v161 = vmax.f32 %v129, 0.0
    %v162 = vmax.f32 %v132, 0.0
    %v163 = vmax.f32 %v135, 0.0
    %v164 = vmax.f32 %v138, 0.0
    %v165 = vmax.f32 %v141, 0.0
    %v166 = vmax.f32 %v144, 0.0
    %v167 = vmax.f32 %v147, 0.0
    %v168 = vmax.f32 %v150, 0.0
    %v169 = vmax.f32 %v153, 0.0
    %v170 = vmax.f32 %v156, 0.0
    %vm171 = vcmask 130048
    %v172 = vsel %vm171, %v158, 0.0
    %v173 = vsel %vm171, %v159, 0.0
    %v174 = vadd.f32 %v172, %v173
    %v175 = vsel %vm171, %v160, 0.0
    %v176 = vadd.f32 %v174, %v175
    %v177 = vsel %vm171, %v161, 0.0
    %v178 = vadd.f32 %v176, %v177
    %v179 = vsel %vm171, %v162, 0.0
    %v180 = vadd.f32 %v178, %v179
    %v181 = vsel %vm171, %v163, 0.0
    %v182 = vadd.f32 %v180, %v181
    %v183 = vsel %vm171, %v164, 0.0
    %v184 = vadd.f32 %v182, %v183
    %v185 = vsel %vm171, %v165, 0.0
    %v186 = vadd.f32 %v184, %v185
    %v187 = vsel %vm171, %v166, 0.0
    %v188 = vadd.f32 %v186, %v187
    %v189 = vsel %vm171, %v167, 0.0
    %v190 = vadd.f32 %v188, %v189
    %v191 = vsel %vm171, %v168, 0.0
    %v192 = vadd.f32 %v190, %v191
    %v193 = vsel %vm171, %v169, 0.0
    %v194 = vadd.f32 %v192, %v193
    %vm195 = vcmask 123904
    %v196 = vsel %vm195, %v170, 0.0
    %v197 = vadd.f32 %v194, %v196
    %v198 = vrot.slane %v197, 4
    %v199 = vadd.f32 %v197, %v198
    %v200 = vrot.slane %v199, 2
    %v201 = vadd.f32 %v199, %v200
    %v202 = vrot.slane %v201, 1
    %v203 = vadd.f32 %v201, %v202
    %v204 = vmul.f32 %v203, 0.010204081
    %v205 = vmul.f32 %v158, %v158
    %v206 = vmul.f32 %v159, %v159
    %v207 = vmul.f32 %v160, %v160
    %v208 = vmul.f32 %v161, %v161
    %v209 = vmul.f32 %v162, %v162
    %v210 = vmul.f32 %v163, %v163
    %v211 = vmul.f32 %v164, %v164
    %v212 = vmul.f32 %v165, %v165
    %v213 = vmul.f32 %v166, %v166
    %v214 = vmul.f32 %v167, %v167
    %v215 = vmul.f32 %v168, %v168
    %v216 = vmul.f32 %v169, %v169
    %v217 = vmul.f32 %v170, %v170
    %v218 = vsel %vm171, %v205, 0.0
    %v219 = vsel %vm171, %v206, 0.0
    %v220 = vadd.f32 %v218, %v219
    %v221 = vsel %vm171, %v207, 0.0
    %v222 = vadd.f32 %v220, %v221
    %v223 = vsel %vm171, %v208, 0.0
    %v224 = vadd.f32 %v222, %v223
    %v225 = vsel %vm171, %v209, 0.0
    %v226 = vadd.f32 %v224, %v225
    %v227 = vsel %vm171, %v210, 0.0
    %v228 = vadd.f32 %v226, %v227
    %v229 = vsel %vm171, %v211, 0.0
    %v230 = vadd.f32 %v228, %v229
    %v231 = vsel %vm171, %v212, 0.0
    %v232 = vadd.f32 %v230, %v231
    %v233 = vsel %vm171, %v213, 0.0
    %v234 = vadd.f32 %v232, %v233
    %v235 = vsel %vm171, %v214, 0.0
    %v236 = vadd.f32 %v234, %v235
    %v237 = vsel %vm171, %v215, 0.0
    %v238 = vadd.f32 %v236, %v237
    %v239 = vsel %vm171, %v216, 0.0
    %v240 = vadd.f32 %v238, %v239
    %v241 = vsel %vm195, %v217, 0.0
    %v242 = vadd.f32 %v240, %v241
    %v243 = vrot.slane %v242, 4
    %v244 = vadd.f32 %v242, %v243
    %v245 = vrot.slane %v244, 2
    %v246 = vadd.f32 %v244, %v245
    %v247 = vrot.slane %v246, 1
    %v248 = vadd.f32 %v246, %v247
    %v249 = vmul.f32 %v248, 0.010204081
    %v250 = vmul.f32 %v204, %v204
    %v251 = vsub.f32 %v249, %v250
    %v252 = vmax.f32 %v251, 0.0
    %v253 = vld [vmem:[%s3] sm:$0x1]
    %v254 = vadd.f32 %v252, 1e-05
    %v255 = vrsqrt.pop %v254
    %v256 = vmul.f32 %v255, %v254
    %v257 = vmul.f32 %v256, %v255
    %v258 = vmul.f32 0.5, %v257
    %v259 = vsub.f32 1.5, %v258
    %v260 = vmul.f32 %v255, %v259
    %vm261 = vweird.f32 %v254
    %vm262 = vweird.f32 %v255
    %vm263 = vmor %vm261, %vm262
    %v264 = vsel %vm263, %v255, %v260
    %v265 = vmul.f32 %v253, %v264
    %v266 = vld [vmem:[%s4] sm:$0x1]
    %v267 = vmul.f32 %v204, %v265
    %v268 = vsub.f32 %v266, %v267
    %v270 = vperm.slane %v265, 0
    %v272 = vmul.f32 %v158, %v270
    %v273 = vmul.f32 %v159, %v270
    %v274 = vmul.f32 %v160, %v270
    %v275 = vmul.f32 %v161, %v270
    %v276 = vmul.f32 %v162, %v270
    %v277 = vmul.f32 %v163, %v270
    %v278 = vmul.f32 %v164, %v270
    %v279 = vmul.f32 %v165, %v270
    %v280 = vmul.f32 %v166, %v270
    %v281 = vmul.f32 %v167, %v270
    %v282 = vmul.f32 %v168, %v270
    %v283 = vmul.f32 %v169, %v270
    %v284 = vmul.f32 %v170, %v270
    %v286 = vperm.slane %v268, 0
    %v288 = vadd.f32 %v272, %v286
    %v289 = vadd.f32 %v273, %v286
    %v290 = vadd.f32 %v274, %v286
    %v291 = vadd.f32 %v275, %v286
    %v292 = vadd.f32 %v276, %v286
    %v293 = vadd.f32 %v277, %v286
    %v294 = vadd.f32 %v278, %v286
    %v295 = vadd.f32 %v279, %v286
    %v296 = vadd.f32 %v280, %v286
    %v297 = vadd.f32 %v281, %v286
    %v298 = vadd.f32 %v282, %v286
    %v299 = vadd.f32 %v283, %v286
    %v300 = vadd.f32 %v284, %v286
    %v301 = vld [vmem:[%s5] sm:$0xff]
    %v302 = vld [vmem:[%s5 + $0x8] sm:$0xff]
    %v303 = vld [vmem:[%s5 + $0x10] sm:$0xff]
    %v304 = vld [vmem:[%s5 + $0x18] sm:$0xff]
    %v305 = vld [vmem:[%s5 + $0x20] sm:$0xff]
    %v306 = vld [vmem:[%s5 + $0x28] sm:$0xff]
    %v307 = vld [vmem:[%s5 + $0x30] sm:$0xff]
    %v308 = vld [vmem:[%s5 + $0x38] sm:$0xff]
    %v310 = vsel %vm171, %v288, 0
    %v313 = vsel %vm171, %v289, 0
    %v316 = vsel %vm171, %v290, 0
    %v319 = vsel %vm171, %v291, 0
    %v322 = vsel %vm171, %v292, 0
    %v325 = vsel %vm171, %v293, 0
    %v328 = vsel %vm171, %v294, 0
    %v331 = vsel %vm171, %v295, 0
    %v334 = vsel %vm171, %v296, 0
    %v337 = vsel %vm171, %v297, 0
    %v340 = vsel %vm171, %v298, 0
    %v343 = vsel %vm171, %v299, 0
    %v346 = vsel %vm171, %v300, 0
    %348 = vmatpush.msra.mxu0 0.0
    %349 = vmatpush.msra.mxu0 0.0
    %350 = vmatpush.msra.mxu0 0.0
    %351 = vmatpush.msra.mxu0 0.0
    %352 = vmatpush.msra.mxu0 0.0
    %353 = vmatpush.msra.mxu0 0.0
    %354 = vmatpush.msra.mxu0 0.0
    %355 = vmatpush.msra.mxu0 0.0
    %356 = vmatpush.msra.mxu0 0.0
    %357 = vmatpush.msra.mxu0 0.0
    %358 = vmatpush.msra.mxu0 0.0
    %359 = vmatpush.msra.mxu0 0.0
    %360 = vmatpush.msra.mxu0 0.0
    %361 = vmatpush.msra.mxu0 0.0
    %362 = vmatpush.msra.mxu0 %v305
    %363 = vmatpush.msra.mxu0 %v301
    %364 = vmatmul.f32.gmra.mxu0 %v310
    %v365 = vpop.f32.mrf.mxu0
    %v366 = vadd.f32 0.0, %v365
    %367 = vmatmul.f32.gmra.mxu0 %v313
    %v368 = vpop.f32.mrf.mxu0
    %v369 = vadd.f32 0.0, %v368
    %370 = vmatmul.f32.gmra.mxu0 %v316
    %v371 = vpop.f32.mrf.mxu0
    %v372 = vadd.f32 0.0, %v371
    %373 = vmatmul.f32.gmra.mxu0 %v319
    %v374 = vpop.f32.mrf.mxu0
    %v375 = vadd.f32 0.0, %v374
    %376 = vmatmul.f32.gmra.mxu0 %v322
    %v377 = vpop.f32.mrf.mxu0
    %v378 = vadd.f32 0.0, %v377
    %379 = vmatmul.f32.gmra.mxu0 %v325
    %v380 = vpop.f32.mrf.mxu0
    %v381 = vadd.f32 0.0, %v380
    %382 = vmatmul.f32.gmra.mxu0 %v328
    %v383 = vpop.f32.mrf.mxu0
    %v384 = vadd.f32 0.0, %v383
    %385 = vmatmul.f32.gmra.mxu0 %v331
    %v386 = vpop.f32.mrf.mxu0
    %v387 = vadd.f32 0.0, %v386
    %388 = vmatmul.f32.gmra.mxu0 %v334
    %v389 = vpop.f32.mrf.mxu0
    %v390 = vadd.f32 0.0, %v389
    %391 = vmatmul.f32.gmra.mxu0 %v337
    %v392 = vpop.f32.mrf.mxu0
    %v393 = vadd.f32 0.0, %v392
    %394 = vmatmul.f32.gmra.mxu0 %v340
    %v395 = vpop.f32.mrf.mxu0
    %v396 = vadd.f32 0.0, %v395
    %397 = vmatmul.f32.gmra.mxu0 %v343
    %v398 = vpop.f32.mrf.mxu0
    %v399 = vadd.f32 0.0, %v398
    %400 = vmatmul.f32.gmra.mxu0 %v346
    %v401 = vpop.f32.mrf.mxu0
    %v402 = vadd.f32 0.0, %v401
    %403 = vdwg.mxu0
    %404 = vmatpush.msra.mxu0 0.0
    %405 = vmatpush.msra.mxu0 0.0
    %406 = vmatpush.msra.mxu0 0.0
    %407 = vmatpush.msra.mxu0 0.0
    %408 = vmatpush.msra.mxu0 0.0
    %409 = vmatpush.msra.mxu0 0.0
    %410 = vmatpush.msra.mxu0 0.0
    %411 = vmatpush.msra.mxu0 0.0
    %412 = vmatpush.msra.mxu0 0.0
    %413 = vmatpush.msra.mxu0 0.0
    %414 = vmatpush.msra.mxu0 0.0
    %415 = vmatpush.msra.mxu0 0.0
    %416 = vmatpush.msra.mxu0 0.0
    %417 = vmatpush.msra.mxu0 0.0
    %418 = vmatpush.msra.mxu0 %v306
    %419 = vmatpush.msra.mxu0 %v302
    %420 = vmatmul.f32.gmra.mxu0 %v310
    %v421 = vpop.f32.mrf.mxu0
    %v422 = vadd.f32 0.0, %v421
    %423 = vmatmul.f32.gmra.mxu0 %v313
    %v424 = vpop.f32.mrf.mxu0
    %v425 = vadd.f32 0.0, %v424
    %426 = vmatmul.f32.gmra.mxu0 %v316
    %v427 = vpop.f32.mrf.mxu0
    %v428 = vadd.f32 0.0, %v427
    %429 = vmatmul.f32.gmra.mxu0 %v319
    %v430 = vpop.f32.mrf.mxu0
    %v431 = vadd.f32 0.0, %v430
    %432 = vmatmul.f32.gmra.mxu0 %v322
    %v433 = vpop.f32.mrf.mxu0
    %v434 = vadd.f32 0.0, %v433
    %435 = vmatmul.f32.gmra.mxu0 %v325
    %v436 = vpop.f32.mrf.mxu0
    %v437 = vadd.f32 0.0, %v436
    %438 = vmatmul.f32.gmra.mxu0 %v328
    %v439 = vpop.f32.mrf.mxu0
    %v440 = vadd.f32 0.0, %v439
    %441 = vmatmul.f32.gmra.mxu0 %v331
    %v442 = vpop.f32.mrf.mxu0
    %v443 = vadd.f32 0.0, %v442
    %444 = vmatmul.f32.gmra.mxu0 %v334
    %v445 = vpop.f32.mrf.mxu0
    %v446 = vadd.f32 0.0, %v445
    %447 = vmatmul.f32.gmra.mxu0 %v337
    %v448 = vpop.f32.mrf.mxu0
    %v449 = vadd.f32 0.0, %v448
    %450 = vmatmul.f32.gmra.mxu0 %v340
    %v451 = vpop.f32.mrf.mxu0
    %v452 = vadd.f32 0.0, %v451
    %453 = vmatmul.f32.gmra.mxu0 %v343
    %v454 = vpop.f32.mrf.mxu0
    %v455 = vadd.f32 0.0, %v454
    %456 = vmatmul.f32.gmra.mxu0 %v346
    %v457 = vpop.f32.mrf.mxu0
    %v458 = vadd.f32 0.0, %v457
    %459 = vdwg.mxu0
    %460 = vmatpush.msra.mxu0 0.0
    %461 = vmatpush.msra.mxu0 0.0
    %462 = vmatpush.msra.mxu0 0.0
    %463 = vmatpush.msra.mxu0 0.0
    %464 = vmatpush.msra.mxu0 0.0
    %465 = vmatpush.msra.mxu0 0.0
    %466 = vmatpush.msra.mxu0 0.0
    %467 = vmatpush.msra.mxu0 0.0
    %468 = vmatpush.msra.mxu0 0.0
    %469 = vmatpush.msra.mxu0 0.0
    %470 = vmatpush.msra.mxu0 0.0
    %471 = vmatpush.msra.mxu0 0.0
    %472 = vmatpush.msra.mxu0 0.0
    %473 = vmatpush.msra.mxu0 0.0
    %474 = vmatpush.msra.mxu0 %v307
    %475 = vmatpush.msra.mxu0 %v303
    %476 = vmatmul.f32.gmra.mxu0 %v310
    %v477 = vpop.f32.mrf.mxu0
    %v478 = vadd.f32 0.0, %v477
    %479 = vmatmul.f32.gmra.mxu0 %v313
    %v480 = vpop.f32.mrf.mxu0
    %v481 = vadd.f32 0.0, %v480
    %482 = vmatmul.f32.gmra.mxu0 %v316
    %v483 = vpop.f32.mrf.mxu0
    %v484 = vadd.f32 0.0, %v483
    %485 = vmatmul.f32.gmra.mxu0 %v319
    %v486 = vpop.f32.mrf.mxu0
    %v487 = vadd.f32 0.0, %v486
    %488 = vmatmul.f32.gmra.mxu0 %v322
    %v489 = vpop.f32.mrf.mxu0
    %v490 = vadd.f32 0.0, %v489
    %491 = vmatmul.f32.gmra.mxu0 %v325
    %v492 = vpop.f32.mrf.mxu0
    %v493 = vadd.f32 0.0, %v492
    %494 = vmatmul.f32.gmra.mxu0 %v328
    %v495 = vpop.f32.mrf.mxu0
    %v496 = vadd.f32 0.0, %v495
    %497 = vmatmul.f32.gmra.mxu0 %v331
    %v498 = vpop.f32.mrf.mxu0
    %v499 = vadd.f32 0.0, %v498
    %500 = vmatmul.f32.gmra.mxu0 %v334
    %v501 = vpop.f32.mrf.mxu0
    %v502 = vadd.f32 0.0, %v501
    %503 = vmatmul.f32.gmra.mxu0 %v337
    %v504 = vpop.f32.mrf.mxu0
    %v505 = vadd.f32 0.0, %v504
    %506 = vmatmul.f32.gmra.mxu0 %v340
    %v507 = vpop.f32.mrf.mxu0
    %v508 = vadd.f32 0.0, %v507
    %509 = vmatmul.f32.gmra.mxu0 %v343
    %v510 = vpop.f32.mrf.mxu0
    %v511 = vadd.f32 0.0, %v510
    %512 = vmatmul.f32.gmra.mxu0 %v346
    %v513 = vpop.f32.mrf.mxu0
    %v514 = vadd.f32 0.0, %v513
    %515 = vdwg.mxu0
    %516 = vmatpush.msra.mxu0 0.0
    %517 = vmatpush.msra.mxu0 0.0
    %518 = vmatpush.msra.mxu0 0.0
    %519 = vmatpush.msra.mxu0 0.0
    %520 = vmatpush.msra.mxu0 0.0
    %521 = vmatpush.msra.mxu0 0.0
    %522 = vmatpush.msra.mxu0 0.0
    %523 = vmatpush.msra.mxu0 0.0
    %524 = vmatpush.msra.mxu0 0.0
    %525 = vmatpush.msra.mxu0 0.0
    %526 = vmatpush.msra.mxu0 0.0
    %527 = vmatpush.msra.mxu0 0.0
    %528 = vmatpush.msra.mxu0 0.0
    %529 = vmatpush.msra.mxu0 0.0
    %530 = vmatpush.msra.mxu0 %v308
    %531 = vmatpush.msra.mxu0 %v304
    %532 = vmatmul.f32.gmra.mxu0 %v310
    %v533 = vpop.f32.mrf.mxu0
    %v534 = vadd.f32 0.0, %v533
    %535 = vmatmul.f32.gmra.mxu0 %v313
    %v536 = vpop.f32.mrf.mxu0
    %v537 = vadd.f32 0.0, %v536
    %538 = vmatmul.f32.gmra.mxu0 %v316
    %v539 = vpop.f32.mrf.mxu0
    %v540 = vadd.f32 0.0, %v539
    %541 = vmatmul.f32.gmra.mxu0 %v319
    %v542 = vpop.f32.mrf.mxu0
    %v543 = vadd.f32 0.0, %v542
    %544 = vmatmul.f32.gmra.mxu0 %v322
    %v545 = vpop.f32.mrf.mxu0
    %v546 = vadd.f32 0.0, %v545
    %547 = vmatmul.f32.gmra.mxu0 %v325
    %v548 = vpop.f32.mrf.mxu0
    %v549 = vadd.f32 0.0, %v548
    %550 = vmatmul.f32.gmra.mxu0 %v328
    %v551 = vpop.f32.mrf.mxu0
    %v552 = vadd.f32 0.0, %v551
    %553 = vmatmul.f32.gmra.mxu0 %v331
    %v554 = vpop.f32.mrf.mxu0
    %v555 = vadd.f32 0.0, %v554
    %556 = vmatmul.f32.gmra.mxu0 %v334
    %v557 = vpop.f32.mrf.mxu0
    %v558 = vadd.f32 0.0, %v557
    %559 = vmatmul.f32.gmra.mxu0 %v337
    %v560 = vpop.f32.mrf.mxu0
    %v561 = vadd.f32 0.0, %v560
    %562 = vmatmul.f32.gmra.mxu0 %v340
    %v563 = vpop.f32.mrf.mxu0
    %v564 = vadd.f32 0.0, %v563
    %565 = vmatmul.f32.gmra.mxu0 %v343
    %v566 = vpop.f32.mrf.mxu0
    %v567 = vadd.f32 0.0, %v566
    %568 = vmatmul.f32.gmra.mxu0 %v346
    %v569 = vpop.f32.mrf.mxu0
    %v570 = vadd.f32 0.0, %v569
    %571 = vdwg.mxu0
    %v572 = vld [vmem:[%s7] sm:$0x3]
    %v573 = vld [vmem:[%s6] sm:$0xff]
    %v574 = vld [vmem:[%s6 + $0x8] sm:$0xff]
    %v575 = vld [vmem:[%s6 + $0x10] sm:$0xff]
    %v576 = vld [vmem:[%s6 + $0x18] sm:$0xff]
    %v577 = vld [vmem:[%s6 + $0x20] sm:$0xff]
    %v578 = vld [vmem:[%s6 + $0x28] sm:$0xff]
    %v579 = vld [vmem:[%s6 + $0x30] sm:$0xff]
    %v580 = vld [vmem:[%s6 + $0x38] sm:$0xff]
    %v581 = vld [vmem:[%s6 + $0x40] sm:$0xff]
    %v582 = vld [vmem:[%s6 + $0x48] sm:$0xff]
    %v583 = vld [vmem:[%s6 + $0x50] sm:$0xff]
    %v584 = vld [vmem:[%s6 + $0x58] sm:$0xff]
    %v585 = vld [vmem:[%s6 + $0x60] sm:$0xff]
    %v586 = vld [vmem:[%s6 + $0x68] sm:$0xff]
    %v587 = vld [vmem:[%s6 + $0x70] sm:$0xff]
    %v588 = vld [vmem:[%s6 + $0x78] sm:$0xff]
    %v589 = vld [vmem:[%s6 + $0x80] sm:$0xff]
    %v590 = vld [vmem:[%s6 + $0x88] sm:$0xff]
    %v591 = vld [vmem:[%s6 + $0x90] sm:$0xff]
    %v592 = vld [vmem:[%s6 + $0x98] sm:$0xff]
    %v593 = vld [vmem:[%s6 + $0xa0] sm:$0xff]
    %v594 = vld [vmem:[%s6 + $0xa8] sm:$0xff]
    %v595 = vld [vmem:[%s6 + $0xb0] sm:$0xff]
    %v596 = vld [vmem:[%s6 + $0xb8] sm:$0xff]
    %v597 = vld [vmem:[%s6 + $0xc0] sm:$0xff]
    %v598 = vld [vmem:[%s6 + $0xc8] sm:$0xff]
    %v599 = vld [vmem:[%s6 + $0xd0] sm:$0xff]
    %v600 = vld [vmem:[%s6 + $0xd8] sm:$0xff]
    %v601 = vld [vmem:[%s6 + $0xe0] sm:$0xff]
    %v602 = vld [vmem:[%s6 + $0xe8] sm:$0xff]
    %v603 = vld [vmem:[%s6 + $0xf0] sm:$0xff]
    %v604 = vld [vmem:[%s6 + $0xf8] sm:$0xff]
    %v605 = vld [vmem:[%s6 + $0x100] sm:$0xff]
    %v606 = vld [vmem:[%s6 + $0x108] sm:$0xff]
    %v607 = vld [vmem:[%s6 + $0x110] sm:$0xff]
    %v608 = vld [vmem:[%s6 + $0x118] sm:$0xff]
    %v609 = vld [vmem:[%s6 + $0x120] sm:$0xff]
    %v610 = vld [vmem:[%s6 + $0x128] sm:$0xff]
    %v611 = vld [vmem:[%s6 + $0x130] sm:$0xff]
    %v612 = vld [vmem:[%s6 + $0x138] sm:$0xff]
    %v613 = vld [vmem:[%s6 + $0x140] sm:$0xff]
    %v614 = vld [vmem:[%s6 + $0x148] sm:$0xff]
    %v615 = vld [vmem:[%s6 + $0x150] sm:$0xff]
    %v616 = vld [vmem:[%s6 + $0x158] sm:$0xff]
    %v617 = vld [vmem:[%s6 + $0x160] sm:$0xff]
    %v618 = vld [vmem:[%s6 + $0x168] sm:$0xff]
    %v619 = vld [vmem:[%s6 + $0x170] sm:$0xff]
    %v620 = vld [vmem:[%s6 + $0x178] sm:$0xff]
    %v621 = vld [vmem:[%s6 + $0x180] sm:$0x3]
    %v622 = vld [vmem:[%s6 + $0x188] sm:$0x3]
    %v623 = vld [vmem:[%s6 + $0x190] sm:$0x3]
    %v624 = vld [vmem:[%s6 + $0x198] sm:$0x3]
    %v625 = vmul.f32 %v366, %v573
    %v626 = vmul.f32 %v422, %v574
    %v627 = vmul.f32 %v478, %v575
    %v628 = vmul.f32 %v534, %v576
    %v629 = vmul.f32 %v369, %v577
    %v630 = vmul.f32 %v425, %v578
    %v631 = vmul.f32 %v481, %v579
    %v632 = vmul.f32 %v537, %v580
    %v633 = vmul.f32 %v372, %v581
    %v634 = vmul.f32 %v428, %v582
    %v635 = vmul.f32 %v484, %v583
    %v636 = vmul.f32 %v540, %v584
    %v637 = vmul.f32 %v375, %v585
    %v638 = vmul.f32 %v431, %v586
    %v639 = vmul.f32 %v487, %v587
    %v640 = vmul.f32 %v543, %v588
    %v641 = vmul.f32 %v378, %v589
    %v642 = vmul.f32 %v434, %v590
    %v643 = vmul.f32 %v490, %v591
    %v644 = vmul.f32 %v546, %v592
    %v645 = vmul.f32 %v381, %v593
    %v646 = vmul.f32 %v437, %v594
    %v647 = vmul.f32 %v493, %v595
    %v648 = vmul.f32 %v549, %v596
    %v649 = vmul.f32 %v384, %v597
    %v650 = vmul.f32 %v440, %v598
    %v651 = vmul.f32 %v496, %v599
    %v652 = vmul.f32 %v552, %v600
    %v653 = vmul.f32 %v387, %v601
    %v654 = vmul.f32 %v443, %v602
    %v655 = vmul.f32 %v499, %v603
    %v656 = vmul.f32 %v555, %v604
    %v657 = vmul.f32 %v390, %v605
    %v658 = vmul.f32 %v446, %v606
    %v659 = vmul.f32 %v502, %v607
    %v660 = vmul.f32 %v558, %v608
    %v661 = vmul.f32 %v393, %v609
    %v662 = vmul.f32 %v449, %v610
    %v663 = vmul.f32 %v505, %v611
    %v664 = vmul.f32 %v561, %v612
    %v665 = vmul.f32 %v396, %v613
    %v666 = vmul.f32 %v452, %v614
    %v667 = vmul.f32 %v508, %v615
    %v668 = vmul.f32 %v564, %v616
    %v669 = vmul.f32 %v399, %v617
    %v670 = vmul.f32 %v455, %v618
    %v671 = vmul.f32 %v511, %v619
    %v672 = vmul.f32 %v567, %v620
    %v673 = vmul.f32 %v402, %v621
    %v674 = vmul.f32 %v458, %v622
    %v675 = vmul.f32 %v514, %v623
    %v676 = vmul.f32 %v570, %v624
    %vm677 = vcmask 801792
    %v679 = vsel %vm677, %v572, 0
    %vm681 = vcmask 1041408
    %v683 = vsel %vm681, %v673, 0
    %v686 = vsel %vm681, %v674, 0
    %v689 = vsel %vm681, %v675, 0
    %v692 = vsel %vm681, %v676, 0
    %694 = vmatpush.msra.mxu0 0.0
    %695 = vmatpush.msra.mxu0 0.0
    %696 = vmatpush.msra.mxu0 0.0
    %697 = vmatpush.msra.mxu0 %v683
    %698 = vmatpush.msra.mxu0 %v669
    %699 = vmatpush.msra.mxu0 %v665
    %700 = vmatpush.msra.mxu0 %v661
    %701 = vmatpush.msra.mxu0 %v657
    %702 = vmatpush.msra.mxu0 %v653
    %703 = vmatpush.msra.mxu0 %v649
    %704 = vmatpush.msra.mxu0 %v645
    %705 = vmatpush.msra.mxu0 %v641
    %706 = vmatpush.msra.mxu0 %v637
    %707 = vmatpush.msra.mxu0 %v633
    %708 = vmatpush.msra.mxu0 %v629
    %709 = vmatpush.msra.mxu0 %v625
    %710 = vmatmul.f32.gmra.mxu0 %v679
    %v711 = vpop.f32.mrf.mxu0
    %v712 = vadd.f32 0.0, %v711
    %713 = vdwg.mxu0
    %714 = vmatpush.msra.mxu0 0.0
    %715 = vmatpush.msra.mxu0 0.0
    %716 = vmatpush.msra.mxu0 0.0
    %717 = vmatpush.msra.mxu0 %v686
    %718 = vmatpush.msra.mxu0 %v670
    %719 = vmatpush.msra.mxu0 %v666
    %720 = vmatpush.msra.mxu0 %v662
    %721 = vmatpush.msra.mxu0 %v658
    %722 = vmatpush.msra.mxu0 %v654
    %723 = vmatpush.msra.mxu0 %v650
    %724 = vmatpush.msra.mxu0 %v646
    %725 = vmatpush.msra.mxu0 %v642
    %726 = vmatpush.msra.mxu0 %v638
    %727 = vmatpush.msra.mxu0 %v634
    %728 = vmatpush.msra.mxu0 %v630
    %729 = vmatpush.msra.mxu0 %v626
    %730 = vmatmul.f32.gmra.mxu0 %v679
    %v731 = vpop.f32.mrf.mxu0
    %v732 = vadd.f32 0.0, %v731
    %733 = vdwg.mxu0
    %734 = vmatpush.msra.mxu0 0.0
    %735 = vmatpush.msra.mxu0 0.0
    %736 = vmatpush.msra.mxu0 0.0
    %737 = vmatpush.msra.mxu0 %v689
    %738 = vmatpush.msra.mxu0 %v671
    %739 = vmatpush.msra.mxu0 %v667
    %740 = vmatpush.msra.mxu0 %v663
    %741 = vmatpush.msra.mxu0 %v659
    %742 = vmatpush.msra.mxu0 %v655
    %743 = vmatpush.msra.mxu0 %v651
    %744 = vmatpush.msra.mxu0 %v647
    %745 = vmatpush.msra.mxu0 %v643
    %746 = vmatpush.msra.mxu0 %v639
    %747 = vmatpush.msra.mxu0 %v635
    %748 = vmatpush.msra.mxu0 %v631
    %749 = vmatpush.msra.mxu0 %v627
    %750 = vmatmul.f32.gmra.mxu0 %v679
    %v751 = vpop.f32.mrf.mxu0
    %v752 = vadd.f32 0.0, %v751
    %753 = vdwg.mxu0
    %754 = vmatpush.msra.mxu0 0.0
    %755 = vmatpush.msra.mxu0 0.0
    %756 = vmatpush.msra.mxu0 0.0
    %757 = vmatpush.msra.mxu0 %v692
    %758 = vmatpush.msra.mxu0 %v672
    %759 = vmatpush.msra.mxu0 %v668
    %760 = vmatpush.msra.mxu0 %v664
    %761 = vmatpush.msra.mxu0 %v660
    %762 = vmatpush.msra.mxu0 %v656
    %763 = vmatpush.msra.mxu0 %v652
    %764 = vmatpush.msra.mxu0 %v648
    %765 = vmatpush.msra.mxu0 %v644
    %766 = vmatpush.msra.mxu0 %v640
    %767 = vmatpush.msra.mxu0 %v636
    %768 = vmatpush.msra.mxu0 %v632
    %769 = vmatpush.msra.mxu0 %v628
    %770 = vmatmul.f32.gmra.mxu0 %v679
    %v771 = vpop.f32.mrf.mxu0
    %v772 = vadd.f32 0.0, %v771
    %773 = vdwg.mxu0
    %v774 = vld [vmem:[%s8] sm:$0xff]
    %v775 = vld [vmem:[%s8 + $0x8] sm:$0xff]
    %v776 = vld [vmem:[%s8 + $0x10] sm:$0xff]
    %v777 = vld [vmem:[%s8 + $0x18] sm:$0xff]
    %v778 = vld [vmem:[%s8 + $0x20] sm:$0xff]
    %v779 = vld [vmem:[%s8 + $0x28] sm:$0xff]
    %v780 = vld [vmem:[%s8 + $0x30] sm:$0xff]
    %v781 = vld [vmem:[%s8 + $0x38] sm:$0xff]
    %v782 = vld [vmem:[%s8 + $0x40] sm:$0xff]
    %v783 = vld [vmem:[%s8 + $0x48] sm:$0xff]
    %v784 = vld [vmem:[%s8 + $0x50] sm:$0xff]
    %v785 = vld [vmem:[%s8 + $0x58] sm:$0xff]
    %v786 = vld [vmem:[%s8 + $0x60] sm:$0xff]
    %v787 = vld [vmem:[%s8 + $0x68] sm:$0xff]
    %v788 = vld [vmem:[%s8 + $0x70] sm:$0xff]
    %v789 = vld [vmem:[%s8 + $0x78] sm:$0xff]
    %v790 = vld [vmem:[%s8 + $0x80] sm:$0xff]
    %v791 = vld [vmem:[%s8 + $0x88] sm:$0xff]
    %v792 = vld [vmem:[%s8 + $0x90] sm:$0xff]
    %v793 = vld [vmem:[%s8 + $0x98] sm:$0xff]
    %v794 = vld [vmem:[%s8 + $0xa0] sm:$0xff]
    %v795 = vld [vmem:[%s8 + $0xa8] sm:$0xff]
    %v796 = vld [vmem:[%s8 + $0xb0] sm:$0xff]
    %v797 = vld [vmem:[%s8 + $0xb8] sm:$0xff]
    %v798 = vld [vmem:[%s8 + $0xc0] sm:$0xff]
    %v799 = vld [vmem:[%s8 + $0xc8] sm:$0xff]
    %v800 = vld [vmem:[%s8 + $0xd0] sm:$0xff]
    %v801 = vld [vmem:[%s8 + $0xd8] sm:$0xff]
    %v802 = vld [vmem:[%s8 + $0xe0] sm:$0xff]
    %v803 = vld [vmem:[%s8 + $0xe8] sm:$0xff]
    %v804 = vld [vmem:[%s8 + $0xf0] sm:$0xff]
    %v805 = vld [vmem:[%s8 + $0xf8] sm:$0xff]
    %v806 = vld [vmem:[%s8 + $0x100] sm:$0xff]
    %v807 = vld [vmem:[%s8 + $0x108] sm:$0xff]
    %v808 = vld [vmem:[%s8 + $0x110] sm:$0xff]
    %v809 = vld [vmem:[%s8 + $0x118] sm:$0xff]
    %v810 = vld [vmem:[%s8 + $0x120] sm:$0xff]
    %v811 = vld [vmem:[%s8 + $0x128] sm:$0xff]
    %v812 = vld [vmem:[%s8 + $0x130] sm:$0xff]
    %v813 = vld [vmem:[%s8 + $0x138] sm:$0xff]
    %v814 = vld [vmem:[%s8 + $0x140] sm:$0xff]
    %v815 = vld [vmem:[%s8 + $0x148] sm:$0xff]
    %v816 = vld [vmem:[%s8 + $0x150] sm:$0xff]
    %v817 = vld [vmem:[%s8 + $0x158] sm:$0xff]
    %v818 = vld [vmem:[%s8 + $0x160] sm:$0xff]
    %v819 = vld [vmem:[%s8 + $0x168] sm:$0xff]
    %v820 = vld [vmem:[%s8 + $0x170] sm:$0xff]
    %v821 = vld [vmem:[%s8 + $0x178] sm:$0xff]
    %v822 = vld [vmem:[%s8 + $0x180] sm:$0xff]
    %v823 = vld [vmem:[%s8 + $0x188] sm:$0xff]
    %v824 = vld [vmem:[%s8 + $0x190] sm:$0xff]
    %v825 = vld [vmem:[%s8 + $0x198] sm:$0xff]
    %v826 = vld [vmem:[%s8 + $0x1a0] sm:$0xff]
    %v827 = vld [vmem:[%s8 + $0x1a8] sm:$0xff]
    %v828 = vld [vmem:[%s8 + $0x1b0] sm:$0xff]
    %v829 = vld [vmem:[%s8 + $0x1b8] sm:$0xff]
    %v830 = vld [vmem:[%s8 + $0x1c0] sm:$0xff]
    %v831 = vld [vmem:[%s8 + $0x1c8] sm:$0xff]
    %v832 = vld [vmem:[%s8 + $0x1d0] sm:$0xff]
    %v833 = vld [vmem:[%s8 + $0x1d8] sm:$0xff]
    %v834 = vld [vmem:[%s8 + $0x1e0] sm:$0xff]
    %v835 = vld [vmem:[%s8 + $0x1e8] sm:$0x3]
    %v836 = vld [vmem:[%s9] sm:$0x1]
    %v838 = vperm.slane %v836, 0
    %vm840 = vcmask 867328
    %v842 = vsel %vm840, %v772, 0
    %v845 = vsel %vm681, %v835, 0
    %847 = vmatpush.msra.mxu0 %v789
    %848 = vmatpush.msra.mxu0 %v788
    %849 = vmatpush.msra.mxu0 %v787
    %850 = vmatpush.msra.mxu0 %v786
    %851 = vmatpush.msra.mxu0 %v785
    %852 = vmatpush.msra.mxu0 %v784
    %853 = vmatpush.msra.mxu0 %v783
    %854 = vmatpush.msra.mxu0 %v782
    %855 = vmatpush.msra.mxu0 %v781
    %856 = vmatpush.msra.mxu0 %v780
    %857 = vmatpush.msra.mxu0 %v779
    %858 = vmatpush.msra.mxu0 %v778
    %859 = vmatpush.msra.mxu0 %v777
    %860 = vmatpush.msra.mxu0 %v776
    %861 = vmatpush.msra.mxu0 %v775
    %862 = vmatpush.msra.mxu0 %v774
    %863 = vmatmul.f32.gmra.mxu0 %v712
    %v864 = vpop.f32.mrf.mxu0
    %v865 = vadd.f32 %v838, %v864
    %866 = vdwg.mxu0
    %867 = vmatpush.msra.mxu0 %v805
    %868 = vmatpush.msra.mxu0 %v804
    %869 = vmatpush.msra.mxu0 %v803
    %870 = vmatpush.msra.mxu0 %v802
    %871 = vmatpush.msra.mxu0 %v801
    %872 = vmatpush.msra.mxu0 %v800
    %873 = vmatpush.msra.mxu0 %v799
    %874 = vmatpush.msra.mxu0 %v798
    %875 = vmatpush.msra.mxu0 %v797
    %876 = vmatpush.msra.mxu0 %v796
    %877 = vmatpush.msra.mxu0 %v795
    %878 = vmatpush.msra.mxu0 %v794
    %879 = vmatpush.msra.mxu0 %v793
    %880 = vmatpush.msra.mxu0 %v792
    %881 = vmatpush.msra.mxu0 %v791
    %882 = vmatpush.msra.mxu0 %v790
    %883 = vmatmul.f32.gmra.mxu0 %v732
    %v884 = vpop.f32.mrf.mxu0
    %v885 = vadd.f32 %v865, %v884
    %886 = vdwg.mxu0
    %887 = vmatpush.msra.mxu0 %v821
    %888 = vmatpush.msra.mxu0 %v820
    %889 = vmatpush.msra.mxu0 %v819
    %890 = vmatpush.msra.mxu0 %v818
    %891 = vmatpush.msra.mxu0 %v817
    %892 = vmatpush.msra.mxu0 %v816
    %893 = vmatpush.msra.mxu0 %v815
    %894 = vmatpush.msra.mxu0 %v814
    %895 = vmatpush.msra.mxu0 %v813
    %896 = vmatpush.msra.mxu0 %v812
    %897 = vmatpush.msra.mxu0 %v811
    %898 = vmatpush.msra.mxu0 %v810
    %899 = vmatpush.msra.mxu0 %v809
    %900 = vmatpush.msra.mxu0 %v808
    %901 = vmatpush.msra.mxu0 %v807
    %902 = vmatpush.msra.mxu0 %v806
    %903 = vmatmul.f32.gmra.mxu0 %v752
    %v904 = vpop.f32.mrf.mxu0
    %v905 = vadd.f32 %v885, %v904
    %906 = vdwg.mxu0
    %907 = vmatpush.msra.mxu0 0.0
    %908 = vmatpush.msra.mxu0 0.0
    %909 = vmatpush.msra.mxu0 %v845
    %910 = vmatpush.msra.mxu0 %v834
    %911 = vmatpush.msra.mxu0 %v833
    %912 = vmatpush.msra.mxu0 %v832
    %913 = vmatpush.msra.mxu0 %v831
    %914 = vmatpush.msra.mxu0 %v830
    %915 = vmatpush.msra.mxu0 %v829
    %916 = vmatpush.msra.mxu0 %v828
    %917 = vmatpush.msra.mxu0 %v827
    %918 = vmatpush.msra.mxu0 %v826
    %919 = vmatpush.msra.mxu0 %v825
    %920 = vmatpush.msra.mxu0 %v824
    %921 = vmatpush.msra.mxu0 %v823
    %922 = vmatpush.msra.mxu0 %v822
    %923 = vmatmul.f32.gmra.mxu0 %v842
    %v924 = vpop.f32.mrf.mxu0
    %v925 = vadd.f32 %v905, %v924
    %926 = vdwg.mxu0
    %vm927 = vcmask 74752
    %928 = vst.msk [vmem:[#allocation2] sm:$0x3] %vm927, %v925
    // Predicated region
    $region42: #{branch_forward.1} parent=1 // pred_check
      _
    $region43: #{branch_forward.1} parent=1 // pred_check_branch
      %930 = sbr.rel (0) target = $region45
    $region44: #{branch_forward.1} parent=1 // pred_region
      %932 = vsyncadd [#allocation3], 0
      %s934 = sshll.u32 [#allocation2], 4
      %s935 = int_to_ptr.vmem [resolvable:$true] %s934
      %s936 = sshll.u32 %s10, 4
      %s937 = int_to_ptr.hbm [resolvable:$true] %s936
      %939 = dma.vmem_to_hbm [thread:$0]  %s935, 32, %s937, [#allocation3]
    $region45: #{branch_forward.1} parent=1 // pred_fallthru
      _
    // Predicated region
    $region46: #{branch_forward.1} parent=1 // pred_check
      _
    $region47: #{branch_forward.1} parent=1 // pred_check_branch
      %941 = sbr.rel (0) target = $region49
    $region48: #{branch_forward.1} parent=1 // pred_region
      %943 = dma.done [#allocation3], 32
    $region49: #{branch_forward.1} parent=1 // pred_fallthru
      _
    %944 = vsyncpa [#allocation3], 1

</llo_original>
